<compile_context>
chip_gen: v6e
topology: v6e:2x2x1
jax: 0.10.0
libtpu: 0.0.40
codegen_flags: <defaults>
</compile_context>

<pallas_src>
import functools

import jax
import jax.numpy as jnp
from jax.experimental import pallas as pl
from jax.experimental.pallas import tpu as pltpu


def _round_up(n: int, m: int) -> int:
    return ((n + m - 1) // m) * m


def _mlp_kernel(x_ref, w1_ref, b1_ref, w2_ref, b2_ref, w3_ref, b3_ref, o_ref):
    # fc1 + ReLU (f32 operands, f32 accumulation)
    h = jnp.dot(x_ref[...], w1_ref[...], preferred_element_type=jnp.float32)
    h = jnp.maximum(h + b1_ref[...], 0.0)
    # fc2 + ReLU
    h = jnp.dot(h, w2_ref[...], preferred_element_type=jnp.float32)
    h = jnp.maximum(h + b2_ref[...], 0.0)
    # fc3 + ReLU
    h = jnp.dot(h, w3_ref[...], preferred_element_type=jnp.float32)
    h = jnp.maximum(h + b3_ref[...], 0.0)
    o_ref[...] = h.astype(o_ref.dtype)


@functools.partial(jax.jit, static_argnames=("block_b",))
def contrastive_model_feature(x, params, *, block_b: int = 1024):
    """Fused forward: relu(relu(relu(x@W1+b1)@W2+b2)@W3+b3).

    x: (B, input_dim) float32. Weights stored (in_dim, out_dim); biases (1, out_dim).
    """
    w1, b1, w2, b2, w3, b3 = params
    B, in_dim = x.shape
    h1_dim = w1.shape[1]
    h2_dim = w2.shape[1]
    out_dim = w3.shape[1]

    # Batch tile: 8-sublane aligned, capped at block_b, and capped near half the
    # batch so there are >= 2 grid steps when possible (v7x megacore sharding of
    # the "parallel" batch axis).  No padding: Pallas masks the partial last
    # output block, and the last input block's out-of-range rows never feed a
    # cross-row reduction.
    half = _round_up(max(1, -(-B // 2)), 8)
    tb = max(8, min(block_b, half))
    grid = (pl.cdiv(B, tb),)

    def resident(shape):  # weights/biases: full-array block, constant index_map
        return pl.BlockSpec(shape, lambda i, s=shape: (0,) * len(s))

    out = pl.pallas_call(
        _mlp_kernel,
        out_shape=jax.ShapeDtypeStruct((B, out_dim), jnp.float32),
        grid=grid,
        in_specs=[
            pl.BlockSpec((tb, in_dim), lambda i: (i, 0)),
            resident((in_dim, h1_dim)),
            resident((1, h1_dim)),
            resident((h1_dim, h2_dim)),
            resident((1, h2_dim)),
            resident((h2_dim, out_dim)),
            resident((1, out_dim)),
        ],
        out_specs=pl.BlockSpec((tb, out_dim), lambda i: (i, 0)),
        compiler_params=pltpu.CompilerParams(
            dimension_semantics=("parallel",)),
    )(x, w1, b1, w2, b2, w3, b3)

    return out


def init_params(key, input_dim, hidden_dim, hidden_dim_1, out_dim=128):
    """Deterministic init matching nn.Linear shapes (weights stored (in, out))."""
    ks = jax.random.split(key, 6)

    def linear(kw, kb, fan_in, fan_out):
        bound = 1.0 / jnp.sqrt(fan_in)
        w = jax.random.uniform(kw, (fan_in, fan_out), jnp.float32, -bound, bound)
        b = jax.random.uniform(kb, (1, fan_out), jnp.float32, -bound, bound)
        return w, b

    w1, b1 = linear(ks[0], ks[1], input_dim, hidden_dim)
    w2, b2 = linear(ks[2], ks[3], hidden_dim, hidden_dim_1)
    w3, b3 = linear(ks[4], ks[5], hidden_dim_1, out_dim)
    return (w1, b1, w2, b2, w3, b3)


def reference_forward(x, params):
    """Pure-jnp f32 reference mirroring the torch module's math."""
    w1, b1, w2, b2, w3, b3 = params
    h = jnp.maximum(jnp.dot(x, w1, preferred_element_type=jnp.float32) + b1, 0.0)
    h = jnp.maximum(jnp.dot(h, w2, preferred_element_type=jnp.float32) + b2, 0.0)
    h = jnp.maximum(jnp.dot(h, w3, preferred_element_type=jnp.float32) + b3, 0.0)
    return h


if __name__ == "__main__":
    key = jax.random.PRNGKey(0)
    k_x, k_x2, k_p = jax.random.split(key, 3)

    input_dim, hidden_dim, hidden_dim_1 = 32, 64, 64
    params = init_params(k_p, input_dim, hidden_dim, hidden_dim_1)

    # Small single-tile case (batch=8).
    x_small = jax.random.normal(k_x, (8, input_dim), jnp.float32)
    out_small = jax.block_until_ready(contrastive_model_feature(x_small, params))
    ref_small = reference_forward(x_small, params)
    assert out_small.shape == (8, 128), out_small.shape
    assert jnp.allclose(out_small, ref_small, atol=2e-2, rtol=2e-2), \
        "mismatch vs reference (batch=8)"

    # Non-divisible batch exercising the multi-step grid + masked partial block
    # (batch=300 -> tb=152 -> 2 grid steps, last block partial).
    x_big = jax.random.normal(k_x2, (300, input_dim), jnp.float32)
    out_big = jax.block_until_ready(contrastive_model_feature(x_big, params))
    ref_big = reference_forward(x_big, params)
    assert out_big.shape == (300, 128), out_big.shape
    assert jnp.allclose(out_big, ref_big, atol=2e-2, rtol=2e-2), \
        "mismatch vs reference (batch=300)"

    print("KERNEL_OK")
</pallas_src>

<mosaic_0001>
module attributes {stable_mosaic.version = 11 : i64} {
  func.func @_mlp_kernel(%arg0: i32, %arg1: memref<8x32xf32, #tpu.memory_space<vmem>>, %arg2: memref<32x64xf32, #tpu.memory_space<vmem>>, %arg3: memref<1x64xf32, #tpu.memory_space<vmem>>, %arg4: memref<64x64xf32, #tpu.memory_space<vmem>>, %arg5: memref<1x64xf32, #tpu.memory_space<vmem>>, %arg6: memref<64x128xf32, #tpu.memory_space<vmem>>, %arg7: memref<1x128xf32, #tpu.memory_space<vmem>>, %arg8: memref<8x128xf32, #tpu.memory_space<vmem>>) attributes {dimension_semantics = [#tpu.dimension_semantics<parallel>], iteration_bounds = array<i64: 1>, scalar_prefetch = 0 : i64, scratch_operands = 0 : i64, tpu.core_type = #tpu.core_type<tc>, window_params = [{transform_indices = @transform_0, window_bounds = array<i64: 8, 32>}, {pipeline_mode = #tpu.pipeline_mode<synchronous>, transform_indices = @transform_1, window_bounds = array<i64: 32, 64>}, {pipeline_mode = #tpu.pipeline_mode<synchronous>, transform_indices = @transform_2, window_bounds = array<i64: 1, 64>}, {pipeline_mode = #tpu.pipeline_mode<synchronous>, transform_indices = @transform_3, window_bounds = array<i64: 64, 64>}, {pipeline_mode = #tpu.pipeline_mode<synchronous>, transform_indices = @transform_4, window_bounds = array<i64: 1, 64>}, {pipeline_mode = #tpu.pipeline_mode<synchronous>, transform_indices = @transform_5, window_bounds = array<i64: 64, 128>}, {pipeline_mode = #tpu.pipeline_mode<synchronous>, transform_indices = @transform_6, window_bounds = array<i64: 1, 128>}, {transform_indices = @transform_7, window_bounds = array<i64: 8, 128>}]} {
    %c0 = arith.constant 0 : index
    %c0_0 = arith.constant 0 : index
    %0 = vector.load %arg1[%c0, %c0_0] : memref<8x32xf32, #tpu.memory_space<vmem>>, vector<8x32xf32>
    %c0_1 = arith.constant 0 : index
    %c0_2 = arith.constant 0 : index
    %1 = vector.load %arg2[%c0_1, %c0_2] : memref<32x64xf32, #tpu.memory_space<vmem>>, vector<32x64xf32>
    %cst = arith.constant dense<0.000000e+00> : vector<8x64xf32>
    %2 = tpu.matmul %0, %1, %cst {dimension_numbers = #tpu.dot_dimension_numbers<[1], [0], [0], [1], [0, 0, 1, 1], [], []>} : vector<8x32xf32>, vector<32x64xf32>, vector<8x64xf32> -> vector<8x64xf32>
    %c0_3 = arith.constant 0 : index
    %c0_4 = arith.constant 0 : index
    %3 = vector.load %arg3[%c0_3, %c0_4] : memref<1x64xf32, #tpu.memory_space<vmem>>, vector<1x64xf32>
    %4 = vector.broadcast %3 : vector<1x64xf32> to vector<8x64xf32>
    %5 = arith.addf %2, %4 : vector<8x64xf32>
    %cst_5 = arith.constant 0.000000e+00 : f32
    %6 = vector.broadcast %cst_5 : f32 to vector<8x64xf32>
    %7 = arith.maximumf %5, %6 : vector<8x64xf32>
    %c0_6 = arith.constant 0 : index
    %c0_7 = arith.constant 0 : index
    %8 = vector.load %arg4[%c0_6, %c0_7] : memref<64x64xf32, #tpu.memory_space<vmem>>, vector<64x64xf32>
    %cst_8 = arith.constant dense<0.000000e+00> : vector<8x64xf32>
    %9 = tpu.matmul %7, %8, %cst_8 {dimension_numbers = #tpu.dot_dimension_numbers<[1], [0], [0], [1], [0, 0, 1, 1], [], []>} : vector<8x64xf32>, vector<64x64xf32>, vector<8x64xf32> -> vector<8x64xf32>
    %c0_9 = arith.constant 0 : index
    %c0_10 = arith.constant 0 : index
    %10 = vector.load %arg5[%c0_9, %c0_10] : memref<1x64xf32, #tpu.memory_space<vmem>>, vector<1x64xf32>
    %11 = vector.broadcast %10 : vector<1x64xf32> to vector<8x64xf32>
    %12 = arith.addf %9, %11 : vector<8x64xf32>
    %cst_11 = arith.constant 0.000000e+00 : f32
    %13 = vector.broadcast %cst_11 : f32 to vector<8x64xf32>
    %14 = arith.maximumf %12, %13 : vector<8x64xf32>
    %c0_12 = arith.constant 0 : index
    %c0_13 = arith.constant 0 : index
    %15 = vector.load %arg6[%c0_12, %c0_13] : memref<64x128xf32, #tpu.memory_space<vmem>>, vector<64x128xf32>
    %cst_14 = arith.constant dense<0.000000e+00> : vector<8x128xf32>
    %16 = tpu.matmul %14, %15, %cst_14 {dimension_numbers = #tpu.dot_dimension_numbers<[1], [0], [0], [1], [0, 0, 1, 1], [], []>} : vector<8x64xf32>, vector<64x128xf32>, vector<8x128xf32> -> vector<8x128xf32>
    %c0_15 = arith.constant 0 : index
    %c0_16 = arith.constant 0 : index
    %17 = vector.load %arg7[%c0_15, %c0_16] : memref<1x128xf32, #tpu.memory_space<vmem>>, vector<1x128xf32>
    %18 = vector.broadcast %17 : vector<1x128xf32> to vector<8x128xf32>
    %19 = arith.addf %16, %18 : vector<8x128xf32>
    %cst_17 = arith.constant 0.000000e+00 : f32
    %20 = vector.broadcast %cst_17 : f32 to vector<8x128xf32>
    %21 = arith.maximumf %19, %20 : vector<8x128xf32>
    %c0_18 = arith.constant 0 : index
    %c0_19 = arith.constant 0 : index
    %22 = vector.load %arg8[%c0_18, %c0_19] : memref<8x128xf32, #tpu.memory_space<vmem>>, vector<8x128xf32>
    tpu.vector_store %arg8[%c0_18, %c0_19], %21 {strides = array<i32>} : memref<8x128xf32, #tpu.memory_space<vmem>>, vector<8x128xf32>,
    return
  }
  func.func @transform_0(%arg0: i32) -> (i32, i32) {
    %c0_i32 = arith.constant 0 : i32
    %c0_i32_0 = arith.constant 0 : i32
    return %arg0, %c0_i32 : i32, i32
  }
  func.func @transform_1(%arg0: i32) -> (i32, i32) {
    %c0_i32 = arith.constant 0 : i32
    %c0_i32_0 = arith.constant 0 : i32
    %c0_i32_1 = arith.constant 0 : i32
    return %c0_i32, %c0_i32_0 : i32, i32
  }
  func.func @transform_2(%arg0: i32) -> (i32, i32) {
    %c0_i32 = arith.constant 0 : i32
    %c0_i32_0 = arith.constant 0 : i32
    %c0_i32_1 = arith.constant 0 : i32
    return %c0_i32, %c0_i32_0 : i32, i32
  }
  func.func @transform_3(%arg0: i32) -> (i32, i32) {
    %c0_i32 = arith.constant 0 : i32
    %c0_i32_0 = arith.constant 0 : i32
    %c0_i32_1 = arith.constant 0 : i32
    return %c0_i32, %c0_i32_0 : i32, i32
  }
  func.func @transform_4(%arg0: i32) -> (i32, i32) {
    %c0_i32 = arith.constant 0 : i32
    %c0_i32_0 = arith.constant 0 : i32
    %c0_i32_1 = arith.constant 0 : i32
    return %c0_i32, %c0_i32_0 : i32, i32
  }
  func.func @transform_5(%arg0: i32) -> (i32, i32) {
    %c0_i32 = arith.constant 0 : i32
    %c0_i32_0 = arith.constant 0 : i32
    %c0_i32_1 = arith.constant 0 : i32
    return %c0_i32, %c0_i32_0 : i32, i32
  }
  func.func @transform_6(%arg0: i32) -> (i32, i32) {
    %c0_i32 = arith.constant 0 : i32
    %c0_i32_0 = arith.constant 0 : i32
    %c0_i32_1 = arith.constant 0 : i32
    return %c0_i32, %c0_i32_0 : i32, i32
  }
  func.func @transform_7(%arg0: i32) -> (i32, i32) {
    %c0_i32 = arith.constant 0 : i32
    %c0_i32_0 = arith.constant 0 : i32
    return %arg0, %c0_i32 : i32, i32
  }
}

</mosaic_0001>

<llo_original>
// kernel: contrastive_model_feature.1
$region0: #{contrastive_model_feature.1}
  #allocation0 [shape = 'u32[]', space=smem, size = 0x4, offset = 0x4, fixed_abs, tag = 'smem constant byte address 0x4 - core index']
  #allocation1 [shape = 'u32[144,128]{1,0:T(1,128)}', space=vmem, size = 0x12000, scoped, tag = 'internal scratch']
  %s0 = inlined_call_operand.hbm [shape: f32[8,32], index: 0, kind: input, shape index: {}]
  %s1 = inlined_call_operand.hbm [shape: f32[32,64], index: 1, kind: input, shape index: {}]
  %s2 = inlined_call_operand.vmem [shape: f32[1,64], index: 2, kind: input, shape index: {}]
  %s3 = inlined_call_operand.hbm [shape: f32[64,64], index: 3, kind: input, shape index: {}]
  %s4 = inlined_call_operand.vmem [shape: f32[1,64], index: 4, kind: input, shape index: {}]
  %s5 = inlined_call_operand.hbm [shape: f32[64,128], index: 5, kind: input, shape index: {}]
  %s6 = inlined_call_operand.vmem [shape: f32[1,128], index: 6, kind: input, shape index: {}]
  %s7 = inlined_call_operand.hbm [shape: f32[8,128], index: 7, kind: output, shape index: {}]
  %s8 = sld [smem:[#allocation0]]
  $region54: #{contrastive_model_feature.1} parent=0
    _
  %s10 = ssub.s32 1, %s8
  %s11 = scalar_select 0, %s10, %s8
  $region1: #{contrastive_model_feature.1} parent=0
    #allocation2 [shape = 'u8[4096]{0}', space=vmem, size = 0x1000, scoped, tag = 'input window, operand 0, single buffered']
    #allocation3 [shape = 's32[1]{0}', space=sflag, size = 0x4, scoped, tag = 'scoped memory for contrastive_model_feature.1']
    #allocation4 [shape = 's32[1]{0}', space=sflag, size = 0x4, scoped, tag = 'scoped memory for contrastive_model_feature.1']
    #allocation5 [shape = 'u8[16384]{0}', space=vmem, size = 0x4000, scoped, tag = 'input window, operand 1, single buffered']
    #allocation6 [shape = 's32[1]{0}', space=sflag, size = 0x4, scoped, tag = 'scoped memory for contrastive_model_feature.1']
    #allocation7 [shape = 'u8[32768]{0}', space=vmem, size = 0x8000, scoped, tag = 'input window, operand 3, single buffered']
    #allocation8 [shape = 'u8[32768]{0}', space=vmem, size = 0x8000, scoped, tag = 'input window, operand 5, single buffered']
    #allocation9 [shape = 's32[1]{0}', space=sflag, size = 0x4, scoped, tag = 'scoped memory for contrastive_model_feature.1']
    #allocation10 [shape = 'u8[4096]{0}', space=vmem, size = 0x1000, scoped, tag = 'output window, operand 0, single buffered']
    %12 = vsyncpa [#allocation3], 0
    %13 = vsyncpa [#allocation6], 0
    %14 = vsyncpa [#allocation9], 0
    %15 = vsyncpa [#allocation4], 0
    // Predicated region
    $region2: #{contrastive_model_feature.1} parent=1 // pred_check
      _
    $region3: #{contrastive_model_feature.1} parent=1 // pred_check_branch
      %17 = sbr.rel (0) target = $region5
    $region4: #{contrastive_model_feature.1} parent=1 // pred_region
      %s19 = ssub.s32 128, 128
      %20 = vsyncadd [#allocation3], %s19
      %s22 = sshll.u32 [#allocation2], 4
      %s23 = int_to_ptr.vmem [resolvable:$true] %s22
      %25 = dma.hbm_to_vmem [thread:$0]  %s0, 128, %s23, [#allocation3]
    $region5: #{contrastive_model_feature.1} parent=1 // pred_fallthru
      _
    // Predicated region
    $region6: #{contrastive_model_feature.1} parent=1 // pred_check
      _
    $region7: #{contrastive_model_feature.1} parent=1 // pred_check_branch
      %27 = sbr.rel (0) target = $region9
    $region8: #{contrastive_model_feature.1} parent=1 // pred_region
      %s29 = ssub.s32 512, 512
      %30 = vsyncadd [#allocation6], %s29
      %s31 = sshll.u32 [#allocation5], 4
      %s32 = int_to_ptr.vmem [resolvable:$true] %s31
      %37 = dma.hbm_to_vmem [thread:$0]  %s1, 512, %s32, [#allocation6], 128, 128, 8
    $region9: #{contrastive_model_feature.1} parent=1 // pred_fallthru
      _
    // Predicated region
    $region10: #{contrastive_model_feature.1} parent=1 // pred_check
      _
    $region11: #{contrastive_model_feature.1} parent=1 // pred_check_branch
      %39 = sbr.rel (0) target = $region13
    $region12: #{contrastive_model_feature.1} parent=1 // pred_region
      _
    $region13: #{contrastive_model_feature.1} parent=1 // pred_fallthru
      _
    // Predicated region
    $region14: #{contrastive_model_feature.1} parent=1 // pred_check
      _
    $region15: #{contrastive_model_feature.1} parent=1 // pred_check_branch
      %41 = sbr.rel (0) target = $region17
    $region16: #{contrastive_model_feature.1} parent=1 // pred_region
      %s43 = ssub.s32 1024, 1024
      %44 = vsyncadd [#allocation6], %s43
      %s45 = sshll.u32 [#allocation7], 4
      %s46 = int_to_ptr.vmem [resolvable:$true] %s45
      %51 = dma.hbm_to_vmem [thread:$0]  %s3, 1024, %s46, [#allocation6], 128, 128, 8
    $region17: #{contrastive_model_feature.1} parent=1 // pred_fallthru
      _
    // Predicated region
    $region18: #{contrastive_model_feature.1} parent=1 // pred_check
      _
    $region19: #{contrastive_model_feature.1} parent=1 // pred_check_branch
      %53 = sbr.rel (0) target = $region21
    $region20: #{contrastive_model_feature.1} parent=1 // pred_region
      _
    $region21: #{contrastive_model_feature.1} parent=1 // pred_fallthru
      _
    // Predicated region
    $region22: #{contrastive_model_feature.1} parent=1 // pred_check
      _
    $region23: #{contrastive_model_feature.1} parent=1 // pred_check_branch
      %55 = sbr.rel (0) target = $region25
    $region24: #{contrastive_model_feature.1} parent=1 // pred_region
      %s57 = ssub.s32 1024, 1024
      %58 = vsyncadd [#allocation9], %s57
      %s59 = sshll.u32 [#allocation8], 4
      %s60 = int_to_ptr.vmem [resolvable:$true] %s59
      %65 = dma.hbm_to_vmem [thread:$0]  %s5, 1024, %s60, [#allocation9], 128, 128, 8
    $region25: #{contrastive_model_feature.1} parent=1 // pred_fallthru
      _
    // Predicated region
    $region26: #{contrastive_model_feature.1} parent=1 // pred_check
      _
    $region27: #{contrastive_model_feature.1} parent=1 // pred_check_branch
      %67 = sbr.rel (0) target = $region29
    $region28: #{contrastive_model_feature.1} parent=1 // pred_region
      _
    $region29: #{contrastive_model_feature.1} parent=1 // pred_fallthru
      _
    // Predicated region
    $region30: #{contrastive_model_feature.1} parent=1 // pred_check
      _
    $region31: #{contrastive_model_feature.1} parent=1 // pred_check_branch
      %69 = sbr.rel (0) target = $region33
    $region32: #{contrastive_model_feature.1} parent=1 // pred_region
      %70 = dma.done [#allocation3], 128
    $region33: #{contrastive_model_feature.1} parent=1 // pred_fallthru
      _
    // Predicated region
    $region34: #{contrastive_model_feature.1} parent=1 // pred_check
      _
    $region35: #{contrastive_model_feature.1} parent=1 // pred_check_branch
      %72 = sbr.rel (0) target = $region37
    $region36: #{contrastive_model_feature.1} parent=1 // pred_region
      %73 = dma.done [#allocation6], 512
    $region37: #{contrastive_model_feature.1} parent=1 // pred_fallthru
      _
    // Predicated region
    $region38: #{contrastive_model_feature.1} parent=1 // pred_check
      _
    $region39: #{contrastive_model_feature.1} parent=1 // pred_check_branch
      %75 = sbr.rel (0) target = $region41
    $region40: #{contrastive_model_feature.1} parent=1 // pred_region
      %76 = dma.done [#allocation6], 1024
    $region41: #{contrastive_model_feature.1} parent=1 // pred_fallthru
      _
    // Predicated region
    $region42: #{contrastive_model_feature.1} parent=1 // pred_check
      _
    $region43: #{contrastive_model_feature.1} parent=1 // pred_check_branch
      %78 = sbr.rel (0) target = $region45
    $region44: #{contrastive_model_feature.1} parent=1 // pred_region
      %79 = dma.done [#allocation9], 1024
    $region45: #{contrastive_model_feature.1} parent=1 // pred_fallthru
      _
    %v80 = vld [vmem:[#allocation2] sm:$0xff]
    %v81 = vld [vmem:[#allocation5] sm:$0xff]
    %v82 = vld [vmem:[#allocation5 + $0x8] sm:$0xff]
    %v83 = vld [vmem:[#allocation5 + $0x10] sm:$0xff]
    %v84 = vld [vmem:[#allocation5 + $0x18] sm:$0xff]
    %v85 = vld [vmem:[%s2] sm:$0x1]
    %v87 = vlaneseq
    %v88 = vshrl.u32 %v87, 7
    %v89 = vsub.s32 0, %v88
    %v90 = vrot.slane %v85, %v89
    %vm92 = vcmask 261120
    %v94 = vsel %vm92, %v80, 0
    %96 = vmatprep.subr.mxu0 0.0
    %97 = vmatpush1.msra.mxu0 0.0
    %98 = vmatprep.subr.mxu0 0.0
    %99 = vmatpush1.msra.mxu0 0.0
    %100 = vmatprep.subr.mxu0 0.0
    %101 = vmatpush1.msra.mxu0 0.0
    %102 = vmatprep.subr.mxu0 0.0
    %103 = vmatpush1.msra.mxu0 0.0
    %104 = vmatprep.subr.mxu0 0.0
    %105 = vmatpush1.msra.mxu0 0.0
    %106 = vmatprep.subr.mxu0 0.0
    %107 = vmatpush1.msra.mxu0 0.0
    %108 = vmatprep.subr.mxu0 0.0
    %109 = vmatpush1.msra.mxu0 0.0
    %110 = vmatprep.subr.mxu0 0.0
    %111 = vmatpush1.msra.mxu0 0.0
    %112 = vmatprep.subr.mxu0 0.0
    %113 = vmatpush1.msra.mxu0 0.0
    %114 = vmatprep.subr.mxu0 0.0
    %115 = vmatpush1.msra.mxu0 0.0
    %116 = vmatprep.subr.mxu0 0.0
    %117 = vmatpush1.msra.mxu0 0.0
    %118 = vmatprep.subr.mxu0 0.0
    %119 = vmatpush1.msra.mxu0 0.0
    %120 = vmatprep.subr.mxu0 0.0
    %121 = vmatpush1.msra.mxu0 %v84
    %122 = vmatprep.subr.mxu0 0.0
    %123 = vmatpush1.msra.mxu0 %v83
    %124 = vmatprep.subr.mxu0 0.0
    %125 = vmatpush1.msra.mxu0 %v82
    %126 = vmatprep.subr.mxu0 0.0
    %127 = vmatpush1.msra.mxu0 %v81
    %128 = vmatprep.subr.mxu0 0.0
    %129 = vmatpush2.msra.mxu0 0.0
    %130 = vmatprep.subr.mxu0 0.0
    %131 = vmatpush2.msra.mxu0 0.0
    %132 = vmatprep.subr.mxu0 0.0
    %133 = vmatpush2.msra.mxu0 0.0
    %134 = vmatprep.subr.mxu0 0.0
    %135 = vmatpush2.msra.mxu0 0.0
    %136 = vmatprep.subr.mxu0 0.0
    %137 = vmatpush2.msra.mxu0 0.0
    %138 = vmatprep.subr.mxu0 0.0
    %139 = vmatpush2.msra.mxu0 0.0
    %140 = vmatprep.subr.mxu0 0.0
    %141 = vmatpush2.msra.mxu0 0.0
    %142 = vmatprep.subr.mxu0 0.0
    %143 = vmatpush2.msra.mxu0 0.0
    %144 = vmatprep.subr.mxu0 0.0
    %145 = vmatpush2.msra.mxu0 0.0
    %146 = vmatprep.subr.mxu0 0.0
    %147 = vmatpush2.msra.mxu0 0.0
    %148 = vmatprep.subr.mxu0 0.0
    %149 = vmatpush2.msra.mxu0 0.0
    %150 = vmatprep.subr.mxu0 0.0
    %151 = vmatpush2.msra.mxu0 0.0
    %152 = vmatprep.subr.mxu0 0.0
    %153 = vmatpush2.msra.mxu0 0.0
    %154 = vmatprep.subr.mxu0 0.0
    %155 = vmatpush2.msra.mxu0 0.0
    %156 = vmatprep.subr.mxu0 0.0
    %157 = vmatpush2.msra.mxu0 0.0
    %158 = vmatprep.subr.mxu0 0.0
    %159 = vmatpush2.msra.mxu0 0.0
    %160 = vmatprep.mubr.f32.mxu0 0.0
    %161 = vmatmul.mubr.f32.gmra.mxu0 %v94
    %v162 = vpop.f32.mrf.mxu0
    %v163 = vadd.f32 %v90, %v162
    %v164 = vpop.f32.mrf.mxu0
    %165 = vdwg.mxu0
    %v166 = vmax.f32 %v163, 0.0
    %v167 = vld [vmem:[#allocation7] sm:$0xff]
    %v168 = vld [vmem:[#allocation7 + $0x8] sm:$0xff]
    %v169 = vld [vmem:[#allocation7 + $0x10] sm:$0xff]
    %v170 = vld [vmem:[#allocation7 + $0x18] sm:$0xff]
    %v171 = vld [vmem:[#allocation7 + $0x20] sm:$0xff]
    %v172 = vld [vmem:[#allocation7 + $0x28] sm:$0xff]
    %v173 = vld [vmem:[#allocation7 + $0x30] sm:$0xff]
    %v174 = vld [vmem:[#allocation7 + $0x38] sm:$0xff]
    %v175 = vld [vmem:[%s4] sm:$0x1]
    %v177 = vlaneseq
    %v178 = vshrl.u32 %v177, 7
    %v179 = vsub.s32 0, %v178
    %v180 = vrot.slane %v175, %v179
    %vm182 = vcmask 523264
    %v184 = vsel %vm182, %v166, 0
    %186 = vmatprep.subr.mxu0 0.0
    %187 = vmatpush1.msra.mxu0 0.0
    %188 = vmatprep.subr.mxu0 0.0
    %189 = vmatpush1.msra.mxu0 0.0
    %190 = vmatprep.subr.mxu0 0.0
    %191 = vmatpush1.msra.mxu0 0.0
    %192 = vmatprep.subr.mxu0 0.0
    %193 = vmatpush1.msra.mxu0 0.0
    %194 = vmatprep.subr.mxu0 0.0
    %195 = vmatpush1.msra.mxu0 0.0
    %196 = vmatprep.subr.mxu0 0.0
    %197 = vmatpush1.msra.mxu0 0.0
    %198 = vmatprep.subr.mxu0 0.0
    %199 = vmatpush1.msra.mxu0 0.0
    %200 = vmatprep.subr.mxu0 0.0
    %201 = vmatpush1.msra.mxu0 0.0
    %202 = vmatprep.subr.mxu0 0.0
    %203 = vmatpush1.msra.mxu0 %v174
    %204 = vmatprep.subr.mxu0 0.0
    %205 = vmatpush1.msra.mxu0 %v173
    %206 = vmatprep.subr.mxu0 0.0
    %207 = vmatpush1.msra.mxu0 %v172
    %208 = vmatprep.subr.mxu0 0.0
    %209 = vmatpush1.msra.mxu0 %v171
    %210 = vmatprep.subr.mxu0 0.0
    %211 = vmatpush1.msra.mxu0 %v170
    %212 = vmatprep.subr.mxu0 0.0
    %213 = vmatpush1.msra.mxu0 %v169
    %214 = vmatprep.subr.mxu0 0.0
    %215 = vmatpush1.msra.mxu0 %v168
    %216 = vmatprep.subr.mxu0 0.0
    %217 = vmatpush1.msra.mxu0 %v167
    %218 = vmatprep.subr.mxu0 0.0
    %219 = vmatpush2.msra.mxu0 0.0
    %220 = vmatprep.subr.mxu0 0.0
    %221 = vmatpush2.msra.mxu0 0.0
    %222 = vmatprep.subr.mxu0 0.0
    %223 = vmatpush2.msra.mxu0 0.0
    %224 = vmatprep.subr.mxu0 0.0
    %225 = vmatpush2.msra.mxu0 0.0
    %226 = vmatprep.subr.mxu0 0.0
    %227 = vmatpush2.msra.mxu0 0.0
    %228 = vmatprep.subr.mxu0 0.0
    %229 = vmatpush2.msra.mxu0 0.0
    %230 = vmatprep.subr.mxu0 0.0
    %231 = vmatpush2.msra.mxu0 0.0
    %232 = vmatprep.subr.mxu0 0.0
    %233 = vmatpush2.msra.mxu0 0.0
    %234 = vmatprep.subr.mxu0 0.0
    %235 = vmatpush2.msra.mxu0 0.0
    %236 = vmatprep.subr.mxu0 0.0
    %237 = vmatpush2.msra.mxu0 0.0
    %238 = vmatprep.subr.mxu0 0.0
    %239 = vmatpush2.msra.mxu0 0.0
    %240 = vmatprep.subr.mxu0 0.0
    %241 = vmatpush2.msra.mxu0 0.0
    %242 = vmatprep.subr.mxu0 0.0
    %243 = vmatpush2.msra.mxu0 0.0
    %244 = vmatprep.subr.mxu0 0.0
    %245 = vmatpush2.msra.mxu0 0.0
    %246 = vmatprep.subr.mxu0 0.0
    %247 = vmatpush2.msra.mxu0 0.0
    %248 = vmatprep.subr.mxu0 0.0
    %249 = vmatpush2.msra.mxu0 0.0
    %250 = vmatprep.mubr.f32.mxu0 0.0
    %251 = vmatmul.mubr.f32.gmra.mxu0 %v184
    %v252 = vpop.f32.mrf.mxu0
    %v253 = vadd.f32 %v180, %v252
    %v254 = vpop.f32.mrf.mxu0
    %255 = vdwg.mxu0
    %v256 = vmax.f32 %v253, 0.0
    %v257 = vld [vmem:[#allocation8] sm:$0xff]
    %v258 = vld [vmem:[#allocation8 + $0x8] sm:$0xff]
    %v259 = vld [vmem:[#allocation8 + $0x10] sm:$0xff]
    %v260 = vld [vmem:[#allocation8 + $0x18] sm:$0xff]
    %v261 = vld [vmem:[#allocation8 + $0x20] sm:$0xff]
    %v262 = vld [vmem:[#allocation8 + $0x28] sm:$0xff]
    %v263 = vld [vmem:[#allocation8 + $0x30] sm:$0xff]
    %v264 = vld [vmem:[#allocation8 + $0x38] sm:$0xff]
    %v265 = vld [vmem:[%s6] sm:$0x1]
    %v267 = vlaneseq
    %v268 = vshrl.u32 %v267, 7
    %v269 = vsub.s32 0, %v268
    %v270 = vrot.slane %v265, %v269
    %v273 = vsel %vm182, %v256, 0
    %275 = vmatprep.subr.mxu0 0.0
    %276 = vmatpush1.msra.mxu0 0.0
    %277 = vmatprep.subr.mxu0 0.0
    %278 = vmatpush1.msra.mxu0 0.0
    %279 = vmatprep.subr.mxu0 0.0
    %280 = vmatpush1.msra.mxu0 0.0
    %281 = vmatprep.subr.mxu0 0.0
    %282 = vmatpush1.msra.mxu0 0.0
    %283 = vmatprep.subr.mxu0 0.0
    %284 = vmatpush1.msra.mxu0 0.0
    %285 = vmatprep.subr.mxu0 0.0
    %286 = vmatpush1.msra.mxu0 0.0
    %287 = vmatprep.subr.mxu0 0.0
    %288 = vmatpush1.msra.mxu0 0.0
    %289 = vmatprep.subr.mxu0 0.0
    %290 = vmatpush1.msra.mxu0 0.0
    %291 = vmatprep.subr.mxu0 0.0
    %292 = vmatpush1.msra.mxu0 %v264
    %293 = vmatprep.subr.mxu0 0.0
    %294 = vmatpush1.msra.mxu0 %v263
    %295 = vmatprep.subr.mxu0 0.0
    %296 = vmatpush1.msra.mxu0 %v262
    %297 = vmatprep.subr.mxu0 0.0
    %298 = vmatpush1.msra.mxu0 %v261
    %299 = vmatprep.subr.mxu0 0.0
    %300 = vmatpush1.msra.mxu0 %v260
    %301 = vmatprep.subr.mxu0 0.0
    %302 = vmatpush1.msra.mxu0 %v259
    %303 = vmatprep.subr.mxu0 0.0
    %304 = vmatpush1.msra.mxu0 %v258
    %305 = vmatprep.subr.mxu0 0.0
    %306 = vmatpush1.msra.mxu0 %v257
    %307 = vmatprep.subr.mxu0 0.0
    %308 = vmatpush2.msra.mxu0 0.0
    %309 = vmatprep.subr.mxu0 0.0
    %310 = vmatpush2.msra.mxu0 0.0
    %311 = vmatprep.subr.mxu0 0.0
    %312 = vmatpush2.msra.mxu0 0.0
    %313 = vmatprep.subr.mxu0 0.0
    %314 = vmatpush2.msra.mxu0 0.0
    %315 = vmatprep.subr.mxu0 0.0
    %316 = vmatpush2.msra.mxu0 0.0
    %317 = vmatprep.subr.mxu0 0.0
    %318 = vmatpush2.msra.mxu0 0.0
    %319 = vmatprep.subr.mxu0 0.0
    %320 = vmatpush2.msra.mxu0 0.0
    %321 = vmatprep.subr.mxu0 0.0
    %322 = vmatpush2.msra.mxu0 0.0
    %323 = vmatprep.subr.mxu0 0.0
    %324 = vmatpush2.msra.mxu0 0.0
    %325 = vmatprep.subr.mxu0 0.0
    %326 = vmatpush2.msra.mxu0 0.0
    %327 = vmatprep.subr.mxu0 0.0
    %328 = vmatpush2.msra.mxu0 0.0
    %329 = vmatprep.subr.mxu0 0.0
    %330 = vmatpush2.msra.mxu0 0.0
    %331 = vmatprep.subr.mxu0 0.0
    %332 = vmatpush2.msra.mxu0 0.0
    %333 = vmatprep.subr.mxu0 0.0
    %334 = vmatpush2.msra.mxu0 0.0
    %335 = vmatprep.subr.mxu0 0.0
    %336 = vmatpush2.msra.mxu0 0.0
    %337 = vmatprep.subr.mxu0 0.0
    %338 = vmatpush2.msra.mxu0 0.0
    %339 = vmatprep.mubr.f32.mxu0 0.0
    %340 = vmatmul.mubr.f32.gmra.mxu0 %v273
    %v341 = vpop.f32.mrf.mxu0
    %v342 = vadd.f32 %v270, %v341
    %v343 = vpop.f32.mrf.mxu0
    %344 = vdwg.mxu0
    %v345 = vmax.f32 %v342, 0.0
    %346 = vst [vmem:[#allocation10] sm:$0xff] %v345
    // Predicated region
    $region46: #{contrastive_model_feature.1} parent=1 // pred_check
      _
    $region47: #{contrastive_model_feature.1} parent=1 // pred_check_branch
      %348 = sbr.rel (0) target = $region49
    $region48: #{contrastive_model_feature.1} parent=1 // pred_region
      %s350 = ssub.s32 128, 128
      %351 = vsyncadd [#allocation4], %s350
      %s353 = sshll.u32 [#allocation10], 4
      %s354 = int_to_ptr.vmem [resolvable:$true] %s353
      %356 = dma.vmem_to_hbm [thread:$0]  %s354, 128, %s7, [#allocation4]
    $region49: #{contrastive_model_feature.1} parent=1 // pred_fallthru
      _
    // Predicated region
    $region50: #{contrastive_model_feature.1} parent=1 // pred_check
      _
    $region51: #{contrastive_model_feature.1} parent=1 // pred_check_branch
      %358 = sbr.rel (0) target = $region53
    $region52: #{contrastive_model_feature.1} parent=1 // pred_region
      %359 = dma.done [#allocation4], 128
    $region53: #{contrastive_model_feature.1} parent=1 // pred_fallthru
      _
    %360 = vsyncpa [#allocation3], 1
    %361 = vsyncpa [#allocation6], 1
    %362 = vsyncpa [#allocation9], 1
    %363 = vsyncpa [#allocation4], 1

</llo_original>
